<compile_context>
chip_gen: v7x
topology: tpu7x:2x2x1
jax: 0.10.0
libtpu: 0.0.40
codegen_flags: <defaults>
</compile_context>

<pallas_src>
import jax
import jax.numpy as jnp
from jax.experimental import pallas as pl
from jax.experimental.pallas import tpu as pltpu

HIDDEN = 32          # hidden width of the synthetic flow head
TARGET_TILE = 16384  # pixels per grid step (sweepable 2048..32768); VMEM use stays < ~6 MiB


def _flow_head_kernel(cur_ref, nxt_ref, w1c_ref, w1n_ref, b1_ref, w2_ref, b2_ref, o_ref):
    """Channels-first 1x1-conv MLP flow head on one pixel tile.

    cur_ref / nxt_ref : (c, TP)      current / next frame channels for TP pixels
    w1c / w1n         : (HIDDEN, c)  layer-1 weights (Normalize already folded in)
    b1                : (HIDDEN, 1)
    w2                : (2, HIDDEN)
    b2                : (2, 1)
    o_ref             : (2, TP)      lane-dense flow output
    """
    cur = cur_ref[...].astype(jnp.float32)
    nxt = nxt_ref[...].astype(jnp.float32)
    h = (jnp.dot(w1c_ref[...], cur, preferred_element_type=jnp.float32)
         + jnp.dot(w1n_ref[...], nxt, preferred_element_type=jnp.float32)
         + b1_ref[...])
    h = jnp.maximum(h, 0.0)                                   # ReLU
    o_ref[...] = (jnp.dot(w2_ref[...], h, preferred_element_type=jnp.float32)
                  + b2_ref[...]).astype(o_ref.dtype)


def _pick_tile(hw, target):
    """Largest pixel tile that divides hw, multiple of 128, and <= target."""
    if hw <= target:
        return hw
    for tp in range(target - target % 128, 127, -128):
        if hw % tp == 0:
            return tp
    return hw  # unreachable when 128 | hw


def flow_head(batch, kparams, *, target_tile=TARGET_TILE):
    """batch: (b, c, t, h, w) float in [0,1]; returns per-pair flow (b, t-1, 2, h*w)."""
    w1c, w1n, b1, w2, b2 = kparams
    b, c, t, h, w = batch.shape
    hw = h * w
    n_pairs = t - 1

    if hw % 128 == 0:
        # Zero-copy path: merge (t, h, w) -> t*hw (free reshape).  The cur/next
        # index_maps select frame f / f+1 plus the pixel tile directly in HBM —
        # no transpose, no concatenation, no data duplication.
        tp = _pick_tile(hw, target_tile)
        n_tiles = hw // tp
        frames = batch.reshape(b, c, t * hw)
        cur_spec = pl.BlockSpec((None, c, tp),
                                lambda ib, f, j: (ib, 0, f * n_tiles + j))
        nxt_spec = pl.BlockSpec((None, c, tp),
                                lambda ib, f, j: (ib, 0, (f + 1) * n_tiles + j))
    else:
        # Rare fallback (h*w not 128-aligned): one layout pass so the pixel tile
        # can legally span the full (unaligned) h*w axis.
        tp = hw
        n_tiles = 1
        frames = jnp.transpose(batch, (0, 2, 1, 3, 4)).reshape(b, t, c, hw)
        cur_spec = pl.BlockSpec((None, None, c, tp), lambda ib, f, j: (ib, f, 0, 0))
        nxt_spec = pl.BlockSpec((None, None, c, tp), lambda ib, f, j: (ib, f + 1, 0, 0))

    def _resident(shape):
        # Small weights: full-array block, same block every step -> stays in VMEM.
        return pl.BlockSpec(shape, lambda ib, f, j, _n=len(shape): (0,) * _n)

    grid = (b, n_pairs, n_tiles)
    return pl.pallas_call(
        _flow_head_kernel,
        out_shape=jax.ShapeDtypeStruct((b, n_pairs, 2, hw), jnp.float32),
        grid_spec=pltpu.PrefetchScalarGridSpec(
            num_scalar_prefetch=0,
            grid=grid,
            in_specs=[
                cur_spec,
                nxt_spec,
                _resident(w1c.shape),
                _resident(w1n.shape),
                _resident(b1.shape),
                _resident(w2.shape),
                _resident(b2.shape),
            ],
            out_specs=pl.BlockSpec((None, None, 2, tp),
                                   lambda ib, f, j: (ib, f, 0, j)),
        ),
        compiler_params=pltpu.CompilerParams(
            dimension_semantics=("parallel", "parallel", "parallel")),
    )(frames, frames, w1c, w1n, b1, w2, b2)


def init_params(c, key):
    """Deterministic synthetic flow-head parameters (act on normalized inputs)."""
    k1, k2 = jax.random.split(key)
    cin = 2 * c
    w1 = jax.random.normal(k1, (HIDDEN, cin), jnp.float32) * (1.0 / jnp.sqrt(cin))
    b1 = jnp.zeros((HIDDEN, 1), jnp.float32)
    w2 = jax.random.normal(k2, (2, HIDDEN), jnp.float32) * (1.0 / jnp.sqrt(HIDDEN))
    b2 = jnp.zeros((2, 1), jnp.float32)
    return w1, b1, w2, b2


def fold_normalize(params, c):
    """Fold Normalize(mean=0.5, std=0.5), i.e. x -> 2x - 1, into layer 1 and split W1.

    W @ (2x - 1) + b  ==  (2W) @ x + (b - W @ 1)
    """
    # TODO(synk): ConvertImageDtype's uint8 -> float (/255) step is not applied;
    # inputs are assumed to already be floats in [0, 1] like the demo below.
    w1, b1, w2, b2 = params
    w1c, w1n = w1[:, :c], w1[:, c:]
    b1f = b1 - w1c.sum(axis=1, keepdims=True) - w1n.sum(axis=1, keepdims=True)
    return 2.0 * w1c, 2.0 * w1n, b1f, w2, b2


def optical_flow_forward(batch, params):
    """Mirrors OpticalFlow.forward: batch (b, c, t, h, w) -> flow (b, 2, t, h, w)."""
    b, c, t, h, w = batch.shape
    kparams = fold_normalize(params, c)
    flow = flow_head(batch, kparams)                        # (b, t-1, 2, h*w)
    flow = flow.reshape(b, t - 1, 2, h, w)
    # torch.cat([pred_flows, pred_flows[-1:].unsqueeze(0)]) per batch element:
    flow = jnp.concatenate([flow, flow[:, -1:]], axis=1)    # (b, t, 2, h, w)
    # torch.stack(...).permute(0, 2, 1, 3, 4):
    of = jnp.transpose(flow, (0, 2, 1, 3, 4))               # (b, 2, t, h, w)
    assert of.shape[0] == b
    assert of.shape[2] == t
    return of


def optical_flow_reference(batch, params):
    """Pure-JAX reference of the same synthetic head (for numerics checking)."""
    w1, b1, w2, b2 = params
    b, c, t, h, w = batch.shape
    frames = jnp.transpose(batch, (0, 2, 1, 3, 4))          # (b, t, c, h, w)
    cur = frames[:, :-1].reshape(b, t - 1, c, h * w)
    nxt = frames[:, 1:].reshape(b, t - 1, c, h * w)
    x = jnp.concatenate([cur, nxt], axis=2) * 2.0 - 1.0     # (b, t-1, 2c, hw)
    hid = jnp.einsum('kc,bfcp->bfkp', w1, x,
                     precision=jax.lax.Precision.HIGHEST) + b1[None, None]
    hid = jnp.maximum(hid, 0.0)
    fl = jnp.einsum('ok,bfkp->bfop', w2, hid,
                    precision=jax.lax.Precision.HIGHEST) + b2[None, None]
    fl = fl.reshape(b, t - 1, 2, h, w)
    fl = jnp.concatenate([fl, fl[:, -1:]], axis=1)
    return jnp.transpose(fl, (0, 2, 1, 3, 4))


if __name__ == "__main__":
    key = jax.random.PRNGKey(0)
    k_in, k_par = jax.random.split(key)

    b, c, t, h, w = 2, 3, 4, 16, 16
    # image-like inputs in [0, 1] (pre-Normalize values)
    batch = jax.random.uniform(k_in, (b, c, t, h, w), dtype=jnp.float32)
    params = init_params(c, k_par)

    out = jax.block_until_ready(optical_flow_forward(batch, params))
    ref = jax.block_until_ready(optical_flow_reference(batch, params))

    assert out.shape == (b, 2, t, h, w), out.shape
    assert out.dtype == jnp.float32
    # last two time steps carry identical flow (duplicated last pair)
    assert bool(jnp.allclose(out[:, :, -1], out[:, :, -2]))
    # kernel matches the pure-JAX reference
    assert bool(jnp.allclose(out, ref, atol=2e-2, rtol=2e-2)), \
        float(jnp.max(jnp.abs(out - ref)))
    print("KERNEL_OK")
</pallas_src>

<mosaic_0001>
module attributes {stable_mosaic.version = 11 : i64} {
  func.func @_flow_head_kernel(%arg0: i32, %arg1: i32, %arg2: i32, %arg3: memref<1x3x256xf32, #tpu.memory_space<vmem>>, %arg4: memref<1x3x256xf32, #tpu.memory_space<vmem>>, %arg5: memref<32x3xf32, #tpu.memory_space<vmem>>, %arg6: memref<32x3xf32, #tpu.memory_space<vmem>>, %arg7: memref<32x1xf32, #tpu.memory_space<vmem>>, %arg8: memref<2x32xf32, #tpu.memory_space<vmem>>, %arg9: memref<2x1xf32, #tpu.memory_space<vmem>>, %arg10: memref<1x1x2x256xf32, #tpu.memory_space<vmem>>) attributes {dimension_semantics = [#tpu.dimension_semantics<parallel>, #tpu.dimension_semantics<parallel>, #tpu.dimension_semantics<parallel>], iteration_bounds = array<i64: 2, 3, 1>, scalar_prefetch = 0 : i64, scratch_operands = 0 : i64, tpu.core_type = #tpu.core_type<tc>, window_params = [{transform_indices = @transform_0, window_bounds = array<i64: 1, 3, 256>}, {transform_indices = @transform_1, window_bounds = array<i64: 1, 3, 256>}, {pipeline_mode = #tpu.pipeline_mode<synchronous>, transform_indices = @transform_2, window_bounds = array<i64: 32, 3>}, {pipeline_mode = #tpu.pipeline_mode<synchronous>, transform_indices = @transform_3, window_bounds = array<i64: 32, 3>}, {pipeline_mode = #tpu.pipeline_mode<synchronous>, transform_indices = @transform_4, window_bounds = array<i64: 32, 1>}, {pipeline_mode = #tpu.pipeline_mode<synchronous>, transform_indices = @transform_5, window_bounds = array<i64: 2, 32>}, {pipeline_mode = #tpu.pipeline_mode<synchronous>, transform_indices = @transform_6, window_bounds = array<i64: 2, 1>}, {transform_indices = @transform_7, window_bounds = array<i64: 1, 1, 2, 256>}]} {
    %c0 = arith.constant 0 : index
    %c0_0 = arith.constant 0 : index
    %c0_1 = arith.constant 0 : index
    %0 = vector.load %arg3[%c0, %c0_0, %c0_1] : memref<1x3x256xf32, #tpu.memory_space<vmem>>, vector<1x3x256xf32>
    %1 = vector.shape_cast %0 : vector<1x3x256xf32> to vector<3x256xf32>
    %c0_2 = arith.constant 0 : index
    %c0_3 = arith.constant 0 : index
    %c0_4 = arith.constant 0 : index
    %2 = vector.load %arg4[%c0_2, %c0_3, %c0_4] : memref<1x3x256xf32, #tpu.memory_space<vmem>>, vector<1x3x256xf32>
    %3 = vector.shape_cast %2 : vector<1x3x256xf32> to vector<3x256xf32>
    %c0_5 = arith.constant 0 : index
    %c0_6 = arith.constant 0 : index
    %4 = vector.load %arg5[%c0_5, %c0_6] : memref<32x3xf32, #tpu.memory_space<vmem>>, vector<32x3xf32>
    %cst = arith.constant dense<0.000000e+00> : vector<32x256xf32>
    %5 = tpu.matmul %4, %1, %cst {dimension_numbers = #tpu.dot_dimension_numbers<[1], [0], [0], [1], [0, 0, 1, 1], [], []>} : vector<32x3xf32>, vector<3x256xf32>, vector<32x256xf32> -> vector<32x256xf32>
    %c0_7 = arith.constant 0 : index
    %c0_8 = arith.constant 0 : index
    %6 = vector.load %arg6[%c0_7, %c0_8] : memref<32x3xf32, #tpu.memory_space<vmem>>, vector<32x3xf32>
    %cst_9 = arith.constant dense<0.000000e+00> : vector<32x256xf32>
    %7 = tpu.matmul %6, %3, %cst_9 {dimension_numbers = #tpu.dot_dimension_numbers<[1], [0], [0], [1], [0, 0, 1, 1], [], []>} : vector<32x3xf32>, vector<3x256xf32>, vector<32x256xf32> -> vector<32x256xf32>
    %8 = arith.addf %5, %7 : vector<32x256xf32>
    %c0_10 = arith.constant 0 : index
    %c0_11 = arith.constant 0 : index
    %9 = vector.load %arg7[%c0_10, %c0_11] : memref<32x1xf32, #tpu.memory_space<vmem>>, vector<32x1xf32>
    %10 = vector.broadcast %9 : vector<32x1xf32> to vector<32x256xf32>
    %11 = arith.addf %8, %10 : vector<32x256xf32>
    %cst_12 = arith.constant 0.000000e+00 : f32
    %12 = vector.broadcast %cst_12 : f32 to vector<32x256xf32>
    %13 = arith.maximumf %11, %12 : vector<32x256xf32>
    %c0_13 = arith.constant 0 : index
    %c0_14 = arith.constant 0 : index
    %14 = vector.load %arg8[%c0_13, %c0_14] : memref<2x32xf32, #tpu.memory_space<vmem>>, vector<2x32xf32>
    %cst_15 = arith.constant dense<0.000000e+00> : vector<2x256xf32>
    %15 = tpu.matmul %14, %13, %cst_15 {dimension_numbers = #tpu.dot_dimension_numbers<[1], [0], [0], [1], [0, 0, 1, 1], [], []>} : vector<2x32xf32>, vector<32x256xf32>, vector<2x256xf32> -> vector<2x256xf32>
    %c0_16 = arith.constant 0 : index
    %c0_17 = arith.constant 0 : index
    %16 = vector.load %arg9[%c0_16, %c0_17] : memref<2x1xf32, #tpu.memory_space<vmem>>, vector<2x1xf32>
    %17 = vector.broadcast %16 : vector<2x1xf32> to vector<2x256xf32>
    %18 = arith.addf %15, %17 : vector<2x256xf32>
    %c0_18 = arith.constant 0 : index
    %c0_19 = arith.constant 0 : index
    %c0_20 = arith.constant 0 : index
    %c0_21 = arith.constant 0 : index
    %19 = vector.load %arg10[%c0_18, %c0_19, %c0_20, %c0_21] : memref<1x1x2x256xf32, #tpu.memory_space<vmem>>, vector<1x1x2x256xf32>
    %20 = vector.shape_cast %19 : vector<1x1x2x256xf32> to vector<2x256xf32>
    %21 = vector.shape_cast %18 : vector<2x256xf32> to vector<1x1x2x256xf32>
    tpu.vector_store %arg10[%c0_18, %c0_19, %c0_20, %c0_21], %21 {strides = array<i32>} : memref<1x1x2x256xf32, #tpu.memory_space<vmem>>, vector<1x1x2x256xf32>,
    return
  }
  func.func @transform_0(%arg0: i32, %arg1: i32, %arg2: i32) -> (i32, i32, i32) {
    %c1_i32 = arith.constant 1 : i32
    %0 = arith.muli %arg1, %c1_i32 : i32
    %1 = arith.addi %0, %arg2 : i32
    %c0_i32 = arith.constant 0 : i32
    %c0_i32_0 = arith.constant 0 : i32
    return %arg0, %c0_i32, %1 : i32, i32, i32
  }
  func.func @transform_1(%arg0: i32, %arg1: i32, %arg2: i32) -> (i32, i32, i32) {
    %c1_i32 = arith.constant 1 : i32
    %0 = arith.addi %arg1, %c1_i32 : i32
    %c1_i32_0 = arith.constant 1 : i32
    %1 = arith.muli %0, %c1_i32_0 : i32
    %2 = arith.addi %1, %arg2 : i32
    %c0_i32 = arith.constant 0 : i32
    %c0_i32_1 = arith.constant 0 : i32
    return %arg0, %c0_i32, %2 : i32, i32, i32
  }
  func.func @transform_2(%arg0: i32, %arg1: i32, %arg2: i32) -> (i32, i32) {
    %c0_i32 = arith.constant 0 : i32
    %c0_i32_0 = arith.constant 0 : i32
    %c0_i32_1 = arith.constant 0 : i32
    return %c0_i32, %c0_i32_0 : i32, i32
  }
  func.func @transform_3(%arg0: i32, %arg1: i32, %arg2: i32) -> (i32, i32) {
    %c0_i32 = arith.constant 0 : i32
    %c0_i32_0 = arith.constant 0 : i32
    %c0_i32_1 = arith.constant 0 : i32
    return %c0_i32, %c0_i32_0 : i32, i32
  }
  func.func @transform_4(%arg0: i32, %arg1: i32, %arg2: i32) -> (i32, i32) {
    %c0_i32 = arith.constant 0 : i32
    %c0_i32_0 = arith.constant 0 : i32
    %c0_i32_1 = arith.constant 0 : i32
    return %c0_i32, %c0_i32_0 : i32, i32
  }
  func.func @transform_5(%arg0: i32, %arg1: i32, %arg2: i32) -> (i32, i32) {
    %c0_i32 = arith.constant 0 : i32
    %c0_i32_0 = arith.constant 0 : i32
    %c0_i32_1 = arith.constant 0 : i32
    return %c0_i32, %c0_i32_0 : i32, i32
  }
  func.func @transform_6(%arg0: i32, %arg1: i32, %arg2: i32) -> (i32, i32) {
    %c0_i32 = arith.constant 0 : i32
    %c0_i32_0 = arith.constant 0 : i32
    %c0_i32_1 = arith.constant 0 : i32
    return %c0_i32, %c0_i32_0 : i32, i32
  }
  func.func @transform_7(%arg0: i32, %arg1: i32, %arg2: i32) -> (i32, i32, i32, i32) {
    %c0_i32 = arith.constant 0 : i32
    %c0_i32_0 = arith.constant 0 : i32
    return %arg0, %arg1, %c0_i32, %arg2 : i32, i32, i32, i32
  }
}

</mosaic_0001>

<llo_original>
// kernel: tpu_custom_call.1
$region0: #{tpu_custom_call.1}
  #allocation0 [shape = 'u32[]', space=smem, size = 0x4, offset = 0x4, fixed_abs, tag = 'smem constant byte address 0x4 - core index']
  #allocation1 [shape = 'u32[144,128]{1,0:T(1,128)}', space=vmem, size = 0x12000, scoped, tag = 'internal scratch']
  %s0 = inlined_call_operand.vmem [shape: f32[2,3,1024], index: 0, kind: input, shape index: {}]
  %s1 = inlined_call_operand.vmem [shape: f32[2,3,1024], index: 1, kind: input, shape index: {}]
  %s2 = inlined_call_operand.vmem [shape: f32[32,3], index: 2, kind: input, shape index: {}]
  %s3 = inlined_call_operand.vmem [shape: f32[32,3], index: 3, kind: input, shape index: {}]
  %s4 = inlined_call_operand.vmem [shape: f32[32,1], index: 4, kind: input, shape index: {}]
  %s5 = inlined_call_operand.vmem [shape: f32[2,32], index: 5, kind: input, shape index: {}]
  %s6 = inlined_call_operand.vmem [shape: f32[2,1], index: 6, kind: input, shape index: {}]
  %s7 = inlined_call_operand.hbm [shape: f32[2,3,2,256], index: 7, kind: output, shape index: {}]
  %s8 = sld [smem:[#allocation0]]
  $region61: #{tpu_custom_call.1} parent=0
    _
  %s10 = ssub.s32 1, %s8
  %s11 = scalar_select 0, %s10, %s8
  $region1: #{tpu_custom_call.1} parent=0
    #allocation2 [shape = 'u8[4096]{0}', space=vmem, size = 0x1000, scoped, tag = 'output window, operand 0']
    #allocation3 [shape = 's32[2]{0}', space=sflag, size = 0x8, scoped, tag = 'scoped memory for tpu_custom_call.1']
    %12 = vsyncpa [#allocation3], 0
    %s13 = scalar_lea.sflag [#allocation3], 1
    %14 = vsyncpa %s13, 0
    loop: start=0, step=1, limit=8
    $region2: #{tpu_custom_call.1} parent=1 // loop_pre_header
      _
    $region3: #{tpu_custom_call.1} parent=1 // loop_header
      %s16 = sphi 0, %s20
      %p17 = scmp.ge.s32.totalorder %s16, 8
      %s23 = sphi 0, %s42
      %s24 = sphi 0, %s38
      %s25 = sphi 0, %s34
      %s26 = sphi 0, %s23
      %s27 = sphi 0, %s24
      %s28 = sphi 0, %s25
      %s29 = sphi 0, %s26
      %s30 = sphi 0, %s27
      %s31 = sphi 0, %s28
      %s49 = sphi 0, %s51
      %s52 = sphi 0, %s49
      %s53 = sphi 0, %s52
      %s69 = sphi 0, %s53
      %s81 = sphi 0, %s83
      %s84 = sphi 0, %s81
      %s85 = sphi 0, %s84
      %s101 = sphi 0, %s85
      %s105 = sphi 0, %s105
      %s107 = sphi 0, %s105
      %s108 = sphi 0, %s107
      %s122 = sphi 0, %s108
      %s126 = sphi 0, %s126
      %s128 = sphi 0, %s126
      %s129 = sphi 0, %s128
      %s143 = sphi 0, %s129
      %s147 = sphi 0, %s147
      %s149 = sphi 0, %s147
      %s150 = sphi 0, %s149
      %s164 = sphi 0, %s150
      %s168 = sphi 0, %s168
      %s170 = sphi 0, %s168
      %s171 = sphi 0, %s170
      %s185 = sphi 0, %s171
      %s189 = sphi 0, %s189
      %s191 = sphi 0, %s189
      %s192 = sphi 0, %s191
      %s206 = sphi 0, %s192
      %s216 = sphi 0, %s218
      %s219 = sphi 0, %s216
      %s220 = sphi 0, %s219
      %s236 = sphi 0, %s220
    $region4: #{tpu_custom_call.1} parent=1 // loop_header_branch
      %19 = sbr.rel (%p17) target = $region8
    $region5: #{tpu_custom_call.1} parent=1 // loop_body
      %s21 = ssub.s32 %s16, 1
      %s22 = ssub.s32 %s16, 2
      %s32 = sadd.s32 1, %s25
      %p33 = scmp.ge.s32.totalorder %s32, 1
      %s34 = scalar_select %p33, 0, %s32
      %s35 = sadd.s32 1, %s24
      %s36 = scalar_select %p33, %s35, %s24
      %p37 = scmp.ge.s32.totalorder %s36, 3
      %s38 = scalar_select %p37, 0, %s36
      %s39 = sadd.s32 1, %s23
      %s40 = scalar_select %p37, %s39, %s23
      %p41 = scmp.ge.s32.totalorder %s40, 2
      %s42 = scalar_select %p41, 0, %s40
      %s43 = sadd.s32 %s24, %s25
      %s44 = sadd.s32 %s38, %s34
      %s45 = ssub.s32 %s23, %s42
      %s46 = ssub.s32 %s43, %s44
      %s47 = sor.u32 %s45, %s46
      %p48 = scmp.eq.s32.totalorder %s47, 0
      %s50 = sadd.s32 %s49, 1
      %s51 = scalar_select %p48, %s49, %s50
      %p54 = pneg %p48
      %p55 = scmp.eq.s32.totalorder %s16, 5
      %p56 = por %p54, %p55
      %p57 = scmp.ne.s32.totalorder %s49, %s52
      %p58 = scmp.eq.s32.totalorder %s16, 0
      %p59 = por %p57, %p58
      %p60 = scmp.ne.s32.totalorder %s49, %s52
      %p61 = scmp.eq.s32.totalorder %s21, 5
      %p62 = por %p60, %p61
      %p63 = scmp.ne.s32.totalorder %s52, %s53
      %p64 = scmp.eq.s32.totalorder %s21, 0
      %p65 = por %p63, %p64
      %p66 = scmp.ne.s32.totalorder %s52, %s53
      %p67 = scmp.eq.s32.totalorder %s22, 5
      %p68 = por %p66, %p67
      %p70 = scmp.ne.s32.totalorder %s53, %s69
      %p71 = scmp.eq.s32.totalorder %s22, 0
      %p72 = por %p70, %p71
      %s73 = sadd.s32 %s24, 1
      %s74 = sadd.s32 %s73, %s25
      %s75 = sadd.s32 %s38, 1
      %s76 = sadd.s32 %s75, %s34
      %s77 = ssub.s32 %s23, %s42
      %s78 = ssub.s32 %s74, %s76
      %s79 = sor.u32 %s77, %s78
      %p80 = scmp.eq.s32.totalorder %s79, 0
      %s82 = sadd.s32 %s81, 1
      %s83 = scalar_select %p80, %s81, %s82
      %p86 = pneg %p80
      %p87 = scmp.eq.s32.totalorder %s16, 5
      %p88 = por %p86, %p87
      %p89 = scmp.ne.s32.totalorder %s81, %s84
      %p90 = scmp.eq.s32.totalorder %s16, 0
      %p91 = por %p89, %p90
      %p92 = scmp.ne.s32.totalorder %s81, %s84
      %p93 = scmp.eq.s32.totalorder %s21, 5
      %p94 = por %p92, %p93
      %p95 = scmp.ne.s32.totalorder %s84, %s85
      %p96 = scmp.eq.s32.totalorder %s21, 0
      %p97 = por %p95, %p96
      %p98 = scmp.ne.s32.totalorder %s84, %s85
      %p99 = scmp.eq.s32.totalorder %s22, 5
      %p100 = por %p98, %p99
      %p102 = scmp.ne.s32.totalorder %s85, %s101
      %p103 = scmp.eq.s32.totalorder %s22, 0
      %p104 = por %p102, %p103
      %s106 = sadd.s32 %s105, 1
      %p109 = scmp.eq.s32.totalorder %s16, 5
      %p110 = scmp.ne.s32.totalorder %s105, %s107
      %p111 = scmp.eq.s32.totalorder %s16, 0
      %p112 = por %p110, %p111
      %p113 = scmp.ne.s32.totalorder %s105, %s107
      %p114 = scmp.eq.s32.totalorder %s21, 5
      %p115 = por %p113, %p114
      %p116 = scmp.ne.s32.totalorder %s107, %s108
      %p117 = scmp.eq.s32.totalorder %s21, 0
      %p118 = por %p116, %p117
      %p119 = scmp.ne.s32.totalorder %s107, %s108
      %p120 = scmp.eq.s32.totalorder %s22, 5
      %p121 = por %p119, %p120
      %p123 = scmp.ne.s32.totalorder %s108, %s122
      %p124 = scmp.eq.s32.totalorder %s22, 0
      %p125 = por %p123, %p124
      %s127 = sadd.s32 %s126, 1
      %p130 = scmp.eq.s32.totalorder %s16, 5
      %p131 = scmp.ne.s32.totalorder %s126, %s128
      %p132 = scmp.eq.s32.totalorder %s16, 0
      %p133 = por %p131, %p132
      %p134 = scmp.ne.s32.totalorder %s126, %s128
      %p135 = scmp.eq.s32.totalorder %s21, 5
      %p136 = por %p134, %p135
      %p137 = scmp.ne.s32.totalorder %s128, %s129
      %p138 = scmp.eq.s32.totalorder %s21, 0
      %p139 = por %p137, %p138
      %p140 = scmp.ne.s32.totalorder %s128, %s129
      %p141 = scmp.eq.s32.totalorder %s22, 5
      %p142 = por %p140, %p141
      %p144 = scmp.ne.s32.totalorder %s129, %s143
      %p145 = scmp.eq.s32.totalorder %s22, 0
      %p146 = por %p144, %p145
      %s148 = sadd.s32 %s147, 1
      %p151 = scmp.eq.s32.totalorder %s16, 5
      %p152 = scmp.ne.s32.totalorder %s147, %s149
      %p153 = scmp.eq.s32.totalorder %s16, 0
      %p154 = por %p152, %p153
      %p155 = scmp.ne.s32.totalorder %s147, %s149
      %p156 = scmp.eq.s32.totalorder %s21, 5
      %p157 = por %p155, %p156
      %p158 = scmp.ne.s32.totalorder %s149, %s150
      %p159 = scmp.eq.s32.totalorder %s21, 0
      %p160 = por %p158, %p159
      %p161 = scmp.ne.s32.totalorder %s149, %s150
      %p162 = scmp.eq.s32.totalorder %s22, 5
      %p163 = por %p161, %p162
      %p165 = scmp.ne.s32.totalorder %s150, %s164
      %p166 = scmp.eq.s32.totalorder %s22, 0
      %p167 = por %p165, %p166
      %s169 = sadd.s32 %s168, 1
      %p172 = scmp.eq.s32.totalorder %s16, 5
      %p173 = scmp.ne.s32.totalorder %s168, %s170
      %p174 = scmp.eq.s32.totalorder %s16, 0
      %p175 = por %p173, %p174
      %p176 = scmp.ne.s32.totalorder %s168, %s170
      %p177 = scmp.eq.s32.totalorder %s21, 5
      %p178 = por %p176, %p177
      %p179 = scmp.ne.s32.totalorder %s170, %s171
      %p180 = scmp.eq.s32.totalorder %s21, 0
      %p181 = por %p179, %p180
      %p182 = scmp.ne.s32.totalorder %s170, %s171
      %p183 = scmp.eq.s32.totalorder %s22, 5
      %p184 = por %p182, %p183
      %p186 = scmp.ne.s32.totalorder %s171, %s185
      %p187 = scmp.eq.s32.totalorder %s22, 0
      %p188 = por %p186, %p187
      %s190 = sadd.s32 %s189, 1
      %p193 = scmp.eq.s32.totalorder %s16, 5
      %p194 = scmp.ne.s32.totalorder %s189, %s191
      %p195 = scmp.eq.s32.totalorder %s16, 0
      %p196 = por %p194, %p195
      %p197 = scmp.ne.s32.totalorder %s189, %s191
      %p198 = scmp.eq.s32.totalorder %s21, 5
      %p199 = por %p197, %p198
      %p200 = scmp.ne.s32.totalorder %s191, %s192
      %p201 = scmp.eq.s32.totalorder %s21, 0
      %p202 = por %p200, %p201
      %p203 = scmp.ne.s32.totalorder %s191, %s192
      %p204 = scmp.eq.s32.totalorder %s22, 5
      %p205 = por %p203, %p204
      %p207 = scmp.ne.s32.totalorder %s192, %s206
      %p208 = scmp.eq.s32.totalorder %s22, 0
      %p209 = por %p207, %p208
      %s210 = ssub.s32 %s23, %s42
      %s211 = ssub.s32 %s24, %s38
      %s212 = sor.u32 %s210, %s211
      %s213 = ssub.s32 %s25, %s34
      %s214 = sor.u32 %s212, %s213
      %p215 = scmp.eq.s32.totalorder %s214, 0
      %s217 = sadd.s32 %s216, 1
      %s218 = scalar_select %p215, %s216, %s217
      %p221 = pneg %p215
      %p222 = scmp.eq.s32.totalorder %s16, 5
      %p223 = por %p221, %p222
      %p224 = scmp.ne.s32.totalorder %s216, %s219
      %p225 = scmp.eq.s32.totalorder %s16, 0
      %p226 = por %p224, %p225
      %p227 = scmp.ne.s32.totalorder %s216, %s219
      %p228 = scmp.eq.s32.totalorder %s21, 5
      %p229 = por %p227, %p228
      %p230 = scmp.ne.s32.totalorder %s219, %s220
      %p231 = scmp.eq.s32.totalorder %s21, 0
      %p232 = por %p230, %p231
      %p233 = scmp.ne.s32.totalorder %s219, %s220
      %p234 = scmp.eq.s32.totalorder %s22, 5
      %p235 = por %p233, %p234
      %p237 = scmp.ne.s32.totalorder %s220, %s236
      %p238 = scmp.eq.s32.totalorder %s22, 0
      %p239 = por %p237, %p238
      %p240 = scmp.le.s32.totalorder 1, %s16
      %p241 = scmp.lt.s32.totalorder %s16, 7
      %p242 = pnand %p240, %p241
      %p243 = pneg %p242
      // Predicated region
      $region9: #{tpu_custom_call.1} parent=5 // pred_check
        _
      $region10: #{tpu_custom_call.1} parent=5 // pred_check_branch
        %245 = sbr.rel (%p242) target = $region12
      $region11: #{tpu_custom_call.1} parent=5 // pred_region
        %s246 = ssub.s32 %s16, 1
        // Predicated region
        $region13: #{tpu_custom_call.1} parent=11 // pred_check
          %p247 = pneg %p118
        $region14: #{tpu_custom_call.1} parent=11 // pred_check_branch
          %249 = sbr.rel (%p247) target = $region16
        $region15: #{tpu_custom_call.1} parent=11 // pred_region
          _
        $region16: #{tpu_custom_call.1} parent=11 // pred_fallthru
          _
        // Predicated region
        $region17: #{tpu_custom_call.1} parent=11 // pred_check
          %p250 = pneg %p139
        $region18: #{tpu_custom_call.1} parent=11 // pred_check_branch
          %252 = sbr.rel (%p250) target = $region20
        $region19: #{tpu_custom_call.1} parent=11 // pred_region
          _
        $region20: #{tpu_custom_call.1} parent=11 // pred_fallthru
          _
        // Predicated region
        $region21: #{tpu_custom_call.1} parent=11 // pred_check
          %p253 = pneg %p160
        $region22: #{tpu_custom_call.1} parent=11 // pred_check_branch
          %255 = sbr.rel (%p253) target = $region24
        $region23: #{tpu_custom_call.1} parent=11 // pred_region
          _
        $region24: #{tpu_custom_call.1} parent=11 // pred_fallthru
          _
        // Predicated region
        $region25: #{tpu_custom_call.1} parent=11 // pred_check
          %p256 = pneg %p181
        $region26: #{tpu_custom_call.1} parent=11 // pred_check_branch
          %258 = sbr.rel (%p256) target = $region28
        $region27: #{tpu_custom_call.1} parent=11 // pred_region
          _
        $region28: #{tpu_custom_call.1} parent=11 // pred_fallthru
          _
        // Predicated region
        $region29: #{tpu_custom_call.1} parent=11 // pred_check
          %p259 = pneg %p202
        $region30: #{tpu_custom_call.1} parent=11 // pred_check_branch
          %261 = sbr.rel (%p259) target = $region32
        $region31: #{tpu_custom_call.1} parent=11 // pred_region
          _
        $region32: #{tpu_custom_call.1} parent=11 // pred_fallthru
          _
      $region12: #{tpu_custom_call.1} parent=5 // pred_fallthru
        _
      %p262 = scmp.lt.s32.totalorder %s16, 6
      // Predicated region
      $region33: #{tpu_custom_call.1} parent=5 // pred_check
        %p263 = pneg %p262
      $region34: #{tpu_custom_call.1} parent=5 // pred_check_branch
        %265 = sbr.rel (%p263) target = $region36
      $region35: #{tpu_custom_call.1} parent=5 // pred_region
        // Predicated region
        $region37: #{tpu_custom_call.1} parent=35 // pred_check
          %p266 = pneg %p59
        $region38: #{tpu_custom_call.1} parent=35 // pred_check_branch
          %268 = sbr.rel (%p266) target = $region40
        $region39: #{tpu_custom_call.1} parent=35 // pred_region
          %s269 = sadd.s32 %s24, %s25
          %s270 = smul.u32 2, %s269
          %p271 = scmp.lt.s32.totalorder %s23, 1
          %s272 = scalar_select %p271, %s23, 1
          %p273 = scmp.lt.s32.totalorder %s270, 7
          %s274 = scalar_select %p273, %s270, 7
          %s275 = smul.addr %s272, 8
          %s276 = sadd.s32 %s274, %s275
          %s277 = smul.addr %s276, 4
          %s278 = scalar_lea.vmem %s0, %s277
          %s279 = sadd.s32 %s24, %s25
          %s280 = smul.u32 2, %s279
        $region40: #{tpu_custom_call.1} parent=35 // pred_fallthru
          _
        // Predicated region
        $region41: #{tpu_custom_call.1} parent=35 // pred_check
          %p281 = pneg %p91
        $region42: #{tpu_custom_call.1} parent=35 // pred_check_branch
          %283 = sbr.rel (%p281) target = $region44
        $region43: #{tpu_custom_call.1} parent=35 // pred_region
          %s284 = sadd.s32 %s24, 1
          %s285 = sadd.s32 %s284, %s25
          %s286 = smul.u32 2, %s285
          %p287 = scmp.lt.s32.totalorder %s23, 1
          %s288 = scalar_select %p287, %s23, 1
          %p289 = scmp.lt.s32.totalorder %s286, 7
          %s290 = scalar_select %p289, %s286, 7
          %s291 = smul.addr %s288, 8
          %s292 = sadd.s32 %s290, %s291
          %s293 = smul.addr %s292, 4
          %s294 = scalar_lea.vmem %s1, %s293
          %s295 = sadd.s32 %s24, 1
          %s296 = sadd.s32 %s295, %s25
          %s297 = smul.u32 2, %s296
        $region44: #{tpu_custom_call.1} parent=35 // pred_fallthru
          _
      $region36: #{tpu_custom_call.1} parent=5 // pred_fallthru
        _
      %p298 = scmp.le.s32.totalorder 1, %s16
      %p299 = scmp.lt.s32.totalorder %s16, 7
      %p300 = pnand %p298, %p299
      %p301 = pneg %p300
      // Predicated region
      $region45: #{tpu_custom_call.1} parent=5 // pred_check
        _
      $region46: #{tpu_custom_call.1} parent=5 // pred_check_branch
        %303 = sbr.rel (%p300) target = $region48
      $region47: #{tpu_custom_call.1} parent=5 // pred_region
        %s304 = ssub.s32 %s16, 1
        %s305 = sadd.s32 %s27, %s28
        %s306 = smul.u32 2, %s305
        %p307 = scmp.lt.s32.totalorder %s26, 1
        %s308 = scalar_select %p307, %s26, 1
        %p309 = scmp.lt.s32.totalorder %s306, 7
        %s310 = scalar_select %p309, %s306, 7
        %s311 = smul.addr %s308, 8
        %s312 = sadd.s32 %s310, %s311
        %s313 = smul.addr %s312, 4
        %s314 = scalar_lea.vmem %s0, %s313
        %p315 = pneg %p65
        %p316 = pneg %p62
        %s317 = sadd.s32 %s27, 1
        %s318 = sadd.s32 %s317, %s28
        %s319 = smul.u32 2, %s318
        %p320 = scmp.lt.s32.totalorder %s26, 1
        %s321 = scalar_select %p320, %s26, 1
        %p322 = scmp.lt.s32.totalorder %s319, 7
        %s323 = scalar_select %p322, %s319, 7
        %s324 = smul.addr %s321, 8
        %s325 = sadd.s32 %s323, %s324
        %s326 = smul.addr %s325, 4
        %s327 = scalar_lea.vmem %s1, %s326
        %p328 = pneg %p97
        %p329 = pneg %p94
        %p330 = pneg %p118
        %p331 = pneg %p115
        %p332 = pneg %p139
        %p333 = pneg %p136
        %p334 = pneg %p160
        %p335 = pneg %p157
        %p336 = pneg %p181
        %p337 = pneg %p178
        %p338 = pneg %p202
        %p339 = pneg %p199
        %p340 = pneg %p232
        %p341 = pneg %p229
        %s342 = sand.u32 %s219, 1
        %s343 = scalar_lea.sflag [#allocation3], %s342
        %s344 = sand.u32 %s219, 1
        %s345 = smul.addr %s344, 4
        %s346 = scalar_lea.vmem [#allocation2], %s345
        %s347 = sadd.s32 %s27, %s28
        %s348 = smul.u32 2, %s347
        %p349 = scmp.lt.s32.totalorder %s26, 1
        %s350 = scalar_select %p349, %s26, 1
        %p351 = scmp.lt.s32.totalorder %s348, 7
        %s352 = scalar_select %p351, %s348, 7
        %s353 = smul.addr %s350, 8
        %s354 = sadd.s32 %s352, %s353
        %s355 = smul.addr %s354, 4
        %s356 = scalar_lea.vmem %s0, %s355
        %s357 = sadd.s32 %s27, %s28
        %s358 = smul.u32 2, %s357
        %s359 = sadd.s32 %s27, 1
        %s360 = sadd.s32 %s359, %s28
        %s361 = smul.u32 2, %s360
        %p362 = scmp.lt.s32.totalorder %s26, 1
        %s363 = scalar_select %p362, %s26, 1
        %p364 = scmp.lt.s32.totalorder %s361, 7
        %s365 = scalar_select %p364, %s361, 7
        %s366 = smul.addr %s363, 8
        %s367 = sadd.s32 %s365, %s366
        %s368 = smul.addr %s367, 4
        %s369 = scalar_lea.vmem %s1, %s368
        %s370 = sadd.s32 %s27, 1
        %s371 = sadd.s32 %s370, %s28
        %s372 = smul.u32 2, %s371
        %s373 = smul.u32 2, %s28
        %v374 = vld [vmem:[%s356] sm:$0x77]
        %v375 = vld [vmem:[%s369] sm:$0x77]
        %v376 = vld [vmem:[%s2] sm:$0xff]
        %v377 = vld [vmem:[%s2 + $0x8] sm:$0xff]
        %v378 = vld [vmem:[%s2 + $0x10] sm:$0xff]
        %v379 = vld [vmem:[%s2 + $0x18] sm:$0xff]
        %v380 = vld [vmem:[%s3] sm:$0xff]
        %v381 = vld [vmem:[%s3 + $0x8] sm:$0xff]
        %v382 = vld [vmem:[%s3 + $0x10] sm:$0xff]
        %v383 = vld [vmem:[%s3 + $0x18] sm:$0xff]
        %v385 = vcombine.high %v375, %v375
        %vm386 = vcmask 23552
        %v388 = vsel %vm386, %v380, 0
        %v391 = vsel %vm386, %v381, 0
        %v394 = vsel %vm386, %v382, 0
        %v397 = vsel %vm386, %v383, 0
        %vm399 = vcmask 1042432
        %v400 = vsel %vm399, %v375, 0
        %v402 = vsel %vm399, %v385, 0
        %404 = vmatprep.subr.mxu0 %v402
        %405 = vmatpush1.msra.mxu0 %v400
        %406 = vmatprep.subr.mxu0 0.0
        %407 = vmatpush1.msra.mxu0 0.0
        %408 = vmatprep.subr.mxu0 0.0
        %409 = vmatpush1.msra.mxu0 0.0
        %410 = vmatprep.subr.mxu0 0.0
        %411 = vmatpush1.msra.mxu0 0.0
        %412 = vmatprep.subr.mxu0 0.0
        %413 = vmatpush1.msra.mxu0 0.0
        %414 = vmatprep.subr.mxu0 0.0
        %415 = vmatpush1.msra.mxu0 0.0
        %416 = vmatprep.subr.mxu0 0.0
        %417 = vmatpush1.msra.mxu0 0.0
        %418 = vmatprep.subr.mxu0 0.0
        %419 = vmatpush1.msra.mxu0 0.0
        %420 = vmatprep.subr.mxu0 0.0
        %421 = vmatpush1.msra.mxu0 0.0
        %422 = vmatprep.subr.mxu0 0.0
        %423 = vmatpush1.msra.mxu0 0.0
        %424 = vmatprep.subr.mxu0 0.0
        %425 = vmatpush1.msra.mxu0 0.0
        %426 = vmatprep.subr.mxu0 0.0
        %427 = vmatpush1.msra.mxu0 0.0
        %428 = vmatprep.subr.mxu0 0.0
        %429 = vmatpush1.msra.mxu0 0.0
        %430 = vmatprep.subr.mxu0 0.0
        %431 = vmatpush1.msra.mxu0 0.0
        %432 = vmatprep.subr.mxu0 0.0
        %433 = vmatpush1.msra.mxu0 0.0
        %434 = vmatprep.subr.mxu0 0.0
        %435 = vmatpush1.msra.mxu0 0.0
        %436 = vmatprep.subr.mxu0 0.0
        %437 = vmatpush1.msra.mxu0 0.0
        %438 = vmatprep.subr.mxu0 0.0
        %439 = vmatpush1.msra.mxu0 0.0
        %440 = vmatprep.subr.mxu0 0.0
        %441 = vmatpush1.msra.mxu0 0.0
        %442 = vmatprep.subr.mxu0 0.0
        %443 = vmatpush1.msra.mxu0 0.0
        %444 = vmatprep.subr.mxu0 0.0
        %445 = vmatpush1.msra.mxu0 0.0
        %446 = vmatprep.subr.mxu0 0.0
        %447 = vmatpush1.msra.mxu0 0.0
        %448 = vmatprep.subr.mxu0 0.0
        %449 = vmatpush1.msra.mxu0 0.0
        %450 = vmatprep.subr.mxu0 0.0
        %451 = vmatpush1.msra.mxu0 0.0
        %452 = vmatprep.subr.mxu0 0.0
        %453 = vmatpush1.msra.mxu0 0.0
        %454 = vmatprep.subr.mxu0 0.0
        %455 = vmatpush1.msra.mxu0 0.0
        %456 = vmatprep.subr.mxu0 0.0
        %457 = vmatpush1.msra.mxu0 0.0
        %458 = vmatprep.subr.mxu0 0.0
        %459 = vmatpush1.msra.mxu0 0.0
        %460 = vmatprep.subr.mxu0 0.0
        %461 = vmatpush1.msra.mxu0 0.0
        %462 = vmatprep.subr.mxu0 0.0
        %463 = vmatpush1.msra.mxu0 0.0
        %464 = vmatprep.subr.mxu0 0.0
        %465 = vmatpush1.msra.mxu0 0.0
        %466 = vmatprep.subr.mxu0 0.0
        %467 = vmatpush1.msra.mxu0 0.0
        %468 = vmatprep.mubr.f32.mxu0 0.0
        %469 = vmatmul.mubr.f32.gmra.mrb[0].mxu0 %v388
        %v470 = vpop.f32.mrb[0].mxu0
        %v471 = vadd.f32 0.0, %v470
        %v472 = vpop.f32.mrb[0].mxu0
        %v473 = vadd.f32 0.0, %v472
        %474 = vmatprep.mubr.f32.mxu0 0.0
        %475 = vmatmul.mubr.f32.gmra.mrb[0].mxu0 %v391
        %v476 = vpop.f32.mrb[0].mxu0
        %v477 = vadd.f32 0.0, %v476
        %v478 = vpop.f32.mrb[0].mxu0
        %v479 = vadd.f32 0.0, %v478
        %480 = vmatprep.mubr.f32.mxu0 0.0
        %481 = vmatmul.mubr.f32.gmra.mrb[0].mxu0 %v394
        %v482 = vpop.f32.mrb[0].mxu0
        %v483 = vadd.f32 0.0, %v482
        %v484 = vpop.f32.mrb[0].mxu0
        %v485 = vadd.f32 0.0, %v484
        %486 = vmatprep.mubr.f32.mxu0 0.0
        %487 = vmatmul.mubr.f32.gmra.mrb[0].mxu0 %v397
        %v488 = vpop.f32.mrb[0].mxu0
        %v489 = vadd.f32 0.0, %v488
        %v490 = vpop.f32.mrb[0].mxu0
        %v491 = vadd.f32 0.0, %v490
        %492 = vdwg.mxu0
        %v494 = vcombine.high %v374, %v374
        %v496 = vsel %vm386, %v376, 0
        %v499 = vsel %vm386, %v377, 0
        %v502 = vsel %vm386, %v378, 0
        %v505 = vsel %vm386, %v379, 0
        %v507 = vsel %vm399, %v374, 0
        %v509 = vsel %vm399, %v494, 0
        %511 = vmatprep.subr.mxu0 %v509
        %512 = vmatpush1.msra.mxu0 %v507
        %513 = vmatprep.subr.mxu0 0.0
        %514 = vmatpush1.msra.mxu0 0.0
        %515 = vmatprep.subr.mxu0 0.0
        %516 = vmatpush1.msra.mxu0 0.0
        %517 = vmatprep.subr.mxu0 0.0
        %518 = vmatpush1.msra.mxu0 0.0
        %519 = vmatprep.subr.mxu0 0.0
        %520 = vmatpush1.msra.mxu0 0.0
        %521 = vmatprep.subr.mxu0 0.0
        %522 = vmatpush1.msra.mxu0 0.0
        %523 = vmatprep.subr.mxu0 0.0
        %524 = vmatpush1.msra.mxu0 0.0
        %525 = vmatprep.subr.mxu0 0.0
        %526 = vmatpush1.msra.mxu0 0.0
        %527 = vmatprep.subr.mxu0 0.0
        %528 = vmatpush1.msra.mxu0 0.0
        %529 = vmatprep.subr.mxu0 0.0
        %530 = vmatpush1.msra.mxu0 0.0
        %531 = vmatprep.subr.mxu0 0.0
        %532 = vmatpush1.msra.mxu0 0.0
        %533 = vmatprep.subr.mxu0 0.0
        %534 = vmatpush1.msra.mxu0 0.0
        %535 = vmatprep.subr.mxu0 0.0
        %536 = vmatpush1.msra.mxu0 0.0
        %537 = vmatprep.subr.mxu0 0.0
        %538 = vmatpush1.msra.mxu0 0.0
        %539 = vmatprep.subr.mxu0 0.0
        %540 = vmatpush1.msra.mxu0 0.0
        %541 = vmatprep.subr.mxu0 0.0
        %542 = vmatpush1.msra.mxu0 0.0
        %543 = vmatprep.subr.mxu0 0.0
        %544 = vmatpush1.msra.mxu0 0.0
        %545 = vmatprep.subr.mxu0 0.0
        %546 = vmatpush1.msra.mxu0 0.0
        %547 = vmatprep.subr.mxu0 0.0
        %548 = vmatpush1.msra.mxu0 0.0
        %549 = vmatprep.subr.mxu0 0.0
        %550 = vmatpush1.msra.mxu0 0.0
        %551 = vmatprep.subr.mxu0 0.0
        %552 = vmatpush1.msra.mxu0 0.0
        %553 = vmatprep.subr.mxu0 0.0
        %554 = vmatpush1.msra.mxu0 0.0
        %555 = vmatprep.subr.mxu0 0.0
        %556 = vmatpush1.msra.mxu0 0.0
        %557 = vmatprep.subr.mxu0 0.0
        %558 = vmatpush1.msra.mxu0 0.0
        %559 = vmatprep.subr.mxu0 0.0
        %560 = vmatpush1.msra.mxu0 0.0
        %561 = vmatprep.subr.mxu0 0.0
        %562 = vmatpush1.msra.mxu0 0.0
        %563 = vmatprep.subr.mxu0 0.0
        %564 = vmatpush1.msra.mxu0 0.0
        %565 = vmatprep.subr.mxu0 0.0
        %566 = vmatpush1.msra.mxu0 0.0
        %567 = vmatprep.subr.mxu0 0.0
        %568 = vmatpush1.msra.mxu0 0.0
        %569 = vmatprep.subr.mxu0 0.0
        %570 = vmatpush1.msra.mxu0 0.0
        %571 = vmatprep.subr.mxu0 0.0
        %572 = vmatpush1.msra.mxu0 0.0
        %573 = vmatprep.subr.mxu0 0.0
        %574 = vmatpush1.msra.mxu0 0.0
        %575 = vmatprep.mubr.f32.mxu0 0.0
        %576 = vmatmul.mubr.f32.gmra.mrb[0].mxu0 %v496
        %v577 = vpop.f32.mrb[0].mxu0
        %v578 = vadd.f32 %v471, %v577
        %v579 = vpop.f32.mrb[0].mxu0
        %v580 = vadd.f32 %v473, %v579
        %581 = vmatprep.mubr.f32.mxu0 0.0
        %582 = vmatmul.mubr.f32.gmra.mrb[0].mxu0 %v499
        %v583 = vpop.f32.mrb[0].mxu0
        %v584 = vadd.f32 %v477, %v583
        %v585 = vpop.f32.mrb[0].mxu0
        %v586 = vadd.f32 %v479, %v585
        %587 = vmatprep.mubr.f32.mxu0 0.0
        %588 = vmatmul.mubr.f32.gmra.mrb[0].mxu0 %v502
        %v589 = vpop.f32.mrb[0].mxu0
        %v590 = vadd.f32 %v483, %v589
        %v591 = vpop.f32.mrb[0].mxu0
        %v592 = vadd.f32 %v485, %v591
        %593 = vmatprep.mubr.f32.mxu0 0.0
        %594 = vmatmul.mubr.f32.gmra.mrb[0].mxu0 %v505
        %v595 = vpop.f32.mrb[0].mxu0
        %v596 = vadd.f32 %v489, %v595
        %v597 = vpop.f32.mrb[0].mxu0
        %v598 = vadd.f32 %v491, %v597
        %599 = vdwg.mxu0
        %v600 = vld [vmem:[%s4] sm:$0xff]
        %v601 = vld [vmem:[%s4 + $0x8] sm:$0xff]
        %v602 = vld [vmem:[%s4 + $0x10] sm:$0xff]
        %v603 = vld [vmem:[%s4 + $0x18] sm:$0xff]
        %605 = vset.pattern.permute.xlu0 0
        %606 = vperm.xlu0 %605, %v600
        %v607 = vpop.permute.xlu0 %606
        %610 = vset.pattern.permute.xlu0 0
        %611 = vperm.xlu0 %610, %v601
        %v612 = vpop.permute.xlu0 %611
        %615 = vset.pattern.permute.xlu0 0
        %616 = vperm.xlu0 %615, %v602
        %v617 = vpop.permute.xlu0 %616
        %620 = vset.pattern.permute.xlu0 0
        %621 = vperm.xlu0 %620, %v603
        %v622 = vpop.permute.xlu0 %621
        %v624 = vadd.f32 %v578, %v607
        %v625 = vadd.f32 %v580, %v607
        %v626 = vadd.f32 %v584, %v612
        %v627 = vadd.f32 %v586, %v612
        %v628 = vadd.f32 %v590, %v617
        %v629 = vadd.f32 %v592, %v617
        %v630 = vadd.f32 %v596, %v622
        %v631 = vadd.f32 %v598, %v622
        %v632 = vmax.f32 %v624, 0.0
        %v633 = vmax.f32 %v625, 0.0
        %v634 = vmax.f32 %v626, 0.0
        %v635 = vmax.f32 %v627, 0.0
        %v636 = vmax.f32 %v628, 0.0
        %v637 = vmax.f32 %v629, 0.0
        %v638 = vmax.f32 %v630, 0.0
        %v639 = vmax.f32 %v631, 0.0
        %v640 = vld [vmem:[%s5] sm:$0x3]
        %v641 = vld [vmem:[%s6] sm:$0x3]
        %643 = vset.pattern.permute.xlu0 0
        %644 = vperm.xlu0 %643, %v641
        %v645 = vpop.permute.xlu0 %644
        %vm647 = vcmask 261120
        %v649 = vsel %vm647, %v640, 0
        %651 = vmatprep.subr.mxu0 %v633
        %652 = vmatpush1.msra.mxu0 %v632
        %653 = vmatprep.subr.mxu0 %v635
        %654 = vmatpush1.msra.mxu0 %v634
        %655 = vmatprep.subr.mxu0 %v637
        %656 = vmatpush1.msra.mxu0 %v636
        %657 = vmatprep.subr.mxu0 %v639
        %658 = vmatpush1.msra.mxu0 %v638
        %659 = vmatprep.subr.mxu0 0.0
        %660 = vmatpush1.msra.mxu0 0.0
        %661 = vmatprep.subr.mxu0 0.0
        %662 = vmatpush1.msra.mxu0 0.0
        %663 = vmatprep.subr.mxu0 0.0
        %664 = vmatpush1.msra.mxu0 0.0
        %665 = vmatprep.subr.mxu0 0.0
        %666 = vmatpush1.msra.mxu0 0.0
        %667 = vmatprep.subr.mxu0 0.0
        %668 = vmatpush1.msra.mxu0 0.0
        %669 = vmatprep.subr.mxu0 0.0
        %670 = vmatpush1.msra.mxu0 0.0
        %671 = vmatprep.subr.mxu0 0.0
        %672 = vmatpush1.msra.mxu0 0.0
        %673 = vmatprep.subr.mxu0 0.0
        %674 = vmatpush1.msra.mxu0 0.0
        %675 = vmatprep.subr.mxu0 0.0
        %676 = vmatpush1.msra.mxu0 0.0
        %677 = vmatprep.subr.mxu0 0.0
        %678 = vmatpush1.msra.mxu0 0.0
        %679 = vmatprep.subr.mxu0 0.0
        %680 = vmatpush1.msra.mxu0 0.0
        %681 = vmatprep.subr.mxu0 0.0
        %682 = vmatpush1.msra.mxu0 0.0
        %683 = vmatprep.subr.mxu0 0.0
        %684 = vmatpush1.msra.mxu0 0.0
        %685 = vmatprep.subr.mxu0 0.0
        %686 = vmatpush1.msra.mxu0 0.0
        %687 = vmatprep.subr.mxu0 0.0
        %688 = vmatpush1.msra.mxu0 0.0
        %689 = vmatprep.subr.mxu0 0.0
        %690 = vmatpush1.msra.mxu0 0.0
        %691 = vmatprep.subr.mxu0 0.0
        %692 = vmatpush1.msra.mxu0 0.0
        %693 = vmatprep.subr.mxu0 0.0
        %694 = vmatpush1.msra.mxu0 0.0
        %695 = vmatprep.subr.mxu0 0.0
        %696 = vmatpush1.msra.mxu0 0.0
        %697 = vmatprep.subr.mxu0 0.0
        %698 = vmatpush1.msra.mxu0 0.0
        %699 = vmatprep.subr.mxu0 0.0
        %700 = vmatpush1.msra.mxu0 0.0
        %701 = vmatprep.subr.mxu0 0.0
        %702 = vmatpush1.msra.mxu0 0.0
        %703 = vmatprep.subr.mxu0 0.0
        %704 = vmatpush1.msra.mxu0 0.0
        %705 = vmatprep.subr.mxu0 0.0
        %706 = vmatpush1.msra.mxu0 0.0
        %707 = vmatprep.subr.mxu0 0.0
        %708 = vmatpush1.msra.mxu0 0.0
        %709 = vmatprep.subr.mxu0 0.0
        %710 = vmatpush1.msra.mxu0 0.0
        %711 = vmatprep.subr.mxu0 0.0
        %712 = vmatpush1.msra.mxu0 0.0
        %713 = vmatprep.subr.mxu0 0.0
        %714 = vmatpush1.msra.mxu0 0.0
        %715 = vmatprep.mubr.f32.mxu0 0.0
        %716 = vmatmul.mubr.f32.gmra.mrb[0].mxu0 %v649
        %v717 = vpop.f32.mrb[0].mxu0
        %v718 = vadd.f32 %v645, %v717
        %v719 = vpop.f32.mrb[0].mxu0
        %v720 = vadd.f32 %v645, %v719
        %721 = vdwg.mxu0
        %v724 = vcombine.low %v718, %v720
        %v726 = vunpack.c.l.s4 1983009808
        %v727 = vunpack.c.0.s8 %v726
        %v728 = vlaneseq
        %v729 = vshrl.u32 %v728, 7
        %v730 = vsub.s32 %v727, %v729
        %v731 = vrot.slane %v724, %v730
        %733 = vst [vmem:[%s346] sm:$0xf] %v731
        %s734 = sand.u32 %s219, 1
        %s735 = scalar_lea.sflag [#allocation3], %s734
        %s736 = sand.u32 %s219, 1
        %s737 = smul.addr %s736, 4
        %s738 = scalar_lea.vmem [#allocation2], %s737
        // Predicated region
        $region49: #{tpu_custom_call.1} parent=47 // pred_check
          %p739 = pneg %p229
        $region50: #{tpu_custom_call.1} parent=47 // pred_check_branch
          %741 = sbr.rel (%p739) target = $region52
        $region51: #{tpu_custom_call.1} parent=47 // pred_region
          %s742 = smul.u32 2, %s28
          %s744 = ssub.s32 64, 64
          %745 = vsyncadd %s735, %s744
          %s746 = smul.addr %s27, 2
          %s747 = sadd.s32 %s742, %s746
          %s748 = smul.addr %s26, 6
          %s749 = sadd.s32 %s747, %s748
          %s750 = smul.addr %s749, 32
          %s751 = scalar_lea.hbm %s7, %s750
          %s753 = sshll.u32 %s738, 4
          %s754 = int_to_ptr.vmem [resolvable:$true] %s753
          %756 = dma.vmem_to_hbm [thread:$0]  %s754, 64, %s751, %s735
        $region52: #{tpu_custom_call.1} parent=47 // pred_fallthru
          _
      $region48: #{tpu_custom_call.1} parent=5 // pred_fallthru
        _
      %p757 = scmp.le.s32.totalorder 2, %s16
      // Predicated region
      $region53: #{tpu_custom_call.1} parent=5 // pred_check
        %p758 = pneg %p757
      $region54: #{tpu_custom_call.1} parent=5 // pred_check_branch
        %760 = sbr.rel (%p758) target = $region56
      $region55: #{tpu_custom_call.1} parent=5 // pred_region
        %s761 = ssub.s32 %s16, 2
        // Predicated region
        $region57: #{tpu_custom_call.1} parent=55 // pred_check
          %p762 = pneg %p235
        $region58: #{tpu_custom_call.1} parent=55 // pred_check_branch
          %764 = sbr.rel (%p762) target = $region60
        $region59: #{tpu_custom_call.1} parent=55 // pred_region
          %s765 = sand.u32 %s220, 1
          %s766 = scalar_lea.sflag [#allocation3], %s765
          %s767 = sand.u32 %s220, 1
          %s768 = smul.addr %s767, 4
          %s769 = scalar_lea.vmem [#allocation2], %s768
          %770 = dma.done %s766, 64
        $region60: #{tpu_custom_call.1} parent=55 // pred_fallthru
          _
      $region56: #{tpu_custom_call.1} parent=5 // pred_fallthru
        _
    $region6: #{tpu_custom_call.1} parent=1 // loop_footer
      %s20 = sadd.s32 1, %s16
    $region7: #{tpu_custom_call.1} parent=1 // loop_footer_branch
      %15 = sbr.rel target = $region3
    $region8: #{tpu_custom_call.1} parent=1 // loop_exit
      _
    %771 = vsyncpa [#allocation3], 1
    %s772 = scalar_lea.sflag [#allocation3], 1
    %773 = vsyncpa %s772, 1

</llo_original>
